<compile_context>
chip_gen: v7x
topology: tpu7x:2x2x1
jax: 0.10.0
libtpu: 0.0.40
codegen_flags: <defaults>
</compile_context>

<pallas_src>
import math

import jax
import jax.numpy as jnp
from jax import lax
from jax.experimental import pallas as pl
from jax.experimental.pallas import tpu as pltpu


# ----------------------------------------------------------------------------
# Kernel: low_res_in = F.interpolate(low_res, scale_factor=2, 'nearest') * c_in
# Input viewed as (B, C*H, W); output written as (B, C*H, 4W), a free contiguous
# view of the final (B, C, 2H, 2W) NCHW tensor (rows 2r / 2r+1 = the two 2W halves).
# ----------------------------------------------------------------------------
def _upsample2x_scale_kernel(c_in_ref, lr_ref, out_ref):
    # c_in_ref: (B,)      f32 in SMEM (per-batch scale)
    # lr_ref:   (rt, W)   input rows for this (batch, row-tile) step
    # out_ref:  (rt, 4W)  final-layout output rows for this step
    b = pl.program_id(0)
    rt, W = lr_ref.shape

    x = lr_ref[...].astype(jnp.float32) * c_in_ref[b]                 # (rt, W) f32

    if out_ref.dtype == jnp.float32:
        # f32 path: keep f32 operands; HIGHEST precision guarantees the one-hot
        # "selection" matmul copies values exactly.
        mm_dtype, prec = jnp.float32, lax.Precision.HIGHEST
    else:
        # bf16 path: 0/1 selection of bf16 values is exact at full bf16 MXU rate.
        mm_dtype, prec = out_ref.dtype, lax.Precision.DEFAULT
        x = x.astype(mm_dtype)

    # One-hot column-duplication matrix, built in-register (no HBM input stream):
    # coldup[j, k] = 1 iff k // 2 == j   =>   (x @ coldup)[:, 2j+d] = x[:, j]
    r_ids = lax.broadcasted_iota(jnp.int32, (W, 2 * W), 0)
    c_ids = lax.broadcasted_iota(jnp.int32, (W, 2 * W), 1)
    coldup = (r_ids == (c_ids >> 1)).astype(mm_dtype)

    y = lax.dot_general(x, coldup, (((1,), (0,)), ((), ())),
                        precision=prec,
                        preferred_element_type=jnp.float32)           # (rt, 2W)
    y = y.astype(out_ref.dtype)

    # Final rows 2r and 2r+1 are the adjacent 2W halves of output view-row r.
    out_ref[:, : 2 * W] = y
    out_ref[:, 2 * W:] = y


def _bytes_per_step(rt, W, dt_bytes):
    """Per-grid-step VMEM footprint incl. f32 intermediates (double-buffered blocks)."""
    in_blk = rt * W * dt_bytes             # input tile
    out_blk = rt * 4 * W * dt_bytes        # output tile
    coldup = W * 2 * W * 4                 # in-register/VMEM one-hot matrix (<= f32)
    x_f32 = rt * W * 4                     # scaled f32 copy of the input tile
    y_f32 = rt * 2 * W * 4                 # matmul result (+ one working copy)
    return 2 * (in_blk + out_blk) + coldup + x_f32 + 2 * y_f32


def _pick_row_tile(rows, W, dt_bytes, budget, rt_cap=1024):
    """Row-tile: multiple of 8 (or the full dim when tiny), shrunk to fit the budget."""
    if rows <= 8:
        return rows
    rt = (min(rows, rt_cap) // 8) * 8
    while rt > 8 and _bytes_per_step(rt, W, dt_bytes) > budget:
        rt -= 8
    return rt


def upsample2x_nearest_scaled(low_res, c_in):
    B, C, H, W = low_res.shape
    rows = C * H
    lr2 = low_res.reshape(B, rows, W)                      # free view

    dt_bytes = jnp.dtype(low_res.dtype).itemsize
    try:
        vmem_cap = int(pltpu.get_tpu_info().vmem_capacity_bytes)
    except Exception:
        vmem_cap = 64 * 2 ** 20                            # conservative (v7x physical)
    # ~45 MiB on v7x (64 MiB VMEM), ~90-100 MiB on v5e/v6e (128 MiB VMEM).
    budget = min(int(0.70 * vmem_cap), 100 * 2 ** 20)

    rt = _pick_row_tile(rows, W, dt_bytes, budget)
    n_row_tiles = pl.cdiv(rows, rt)                        # ragged last tile is masked
    vmem_limit = int(min(0.9 * vmem_cap,
                         max(32 * 2 ** 20, 2 * _bytes_per_step(rt, W, dt_bytes))))

    out3 = pl.pallas_call(
        _upsample2x_scale_kernel,
        out_shape=jax.ShapeDtypeStruct((B, rows, 4 * W), low_res.dtype),
        grid_spec=pl.GridSpec(
            grid=(B, n_row_tiles),
            in_specs=[
                pl.BlockSpec(memory_space=pltpu.MemorySpace.SMEM),     # c_in (B,)
                pl.BlockSpec((None, rt, W), lambda b, r: (b, r, 0)),   # low_res rows
            ],
            out_specs=pl.BlockSpec((None, rt, 4 * W), lambda b, r: (b, r, 0)),
        ),
        compiler_params=pltpu.CompilerParams(
            dimension_semantics=("parallel", "parallel"),
            vmem_limit_bytes=vmem_limit,
        ),
    )(c_in.astype(jnp.float32), lr2)

    # (B, C*H, 4W) -> (B, C, 2H, 2W): contiguous row-major split => free view, no transpose.
    return out3.reshape(B, C, 2 * H, 2 * W)


# ----------------------------------------------------------------------------
# mapping_cond = cat([FourierFeatures(log1p(low_res_sigma)[:, None]), pooler], 1)
# Only B x (embed_dim + pooler_dim) floats; plain JAX (launch overhead would dominate).
# ----------------------------------------------------------------------------
def mapping_cond_fn(low_res_sigma, fourier_weight, pooler):
    c_noise = jnp.log1p(low_res_sigma.astype(jnp.float32))[:, None]           # (B, 1)
    w_row = fourier_weight.reshape(1, -1).astype(jnp.float32)                 # (1, half)
    f = (2.0 * math.pi) * c_noise * w_row                                     # (B, half)
    return jnp.concatenate([jnp.cos(f), jnp.sin(f), pooler.astype(jnp.float32)], axis=1)


# ----------------------------------------------------------------------------
# Module forward
# ----------------------------------------------------------------------------
def noise_level_and_text_conditioned_upscaler_forward(
        params, input, sigma, low_res, low_res_sigma, c, sigma_data=1.0, **kwargs):
    cross_cond, cross_cond_padding, pooler = c
    # Per-batch scalar c_in = 1 / sqrt(low_res_sigma^2 + sigma_data^2)  (B elements).
    c_in = 1.0 / jnp.sqrt(low_res_sigma.astype(jnp.float32) ** 2 + sigma_data ** 2)
    low_res_in = upsample2x_nearest_scaled(low_res, c_in)
    mapping_cond = mapping_cond_fn(low_res_sigma, params["fourier_weight"], pooler)
    # TODO(synk): inner_model (the wrapped U-Net) is an external submodule not defined
    # by this module; return the exact tensors that would be passed to it instead.
    return dict(input=input, sigma=sigma, unet_cond=low_res_in,
                mapping_cond=mapping_cond, cross_cond=cross_cond,
                cross_cond_padding=cross_cond_padding)


if __name__ == "__main__":
    key = jax.random.PRNGKey(0)
    k_w, k_in, k_lr, k_sig, k_lrsig, k_cc, k_pool = jax.random.split(key, 7)

    B, C, H, W = 2, 4, 16, 16
    embed_dim = 256
    pooler_dim = 64
    seq, cross_dim = 8, 32
    sigma_data = 1.0

    # FourierFeatures(1, embed_dim, std=2) weight: (embed_dim // 2, 1), N(0, std^2)
    fourier_weight = jax.random.normal(k_w, (embed_dim // 2, 1), jnp.float32) * 2.0
    params = {"fourier_weight": fourier_weight}

    x = jax.random.normal(k_in, (B, C, 2 * H, 2 * W), jnp.float32)
    sigma = jnp.abs(jax.random.normal(k_sig, (B,), jnp.float32)) + 0.1
    low_res = jax.random.normal(k_lr, (B, C, H, W), jnp.float32)
    low_res_sigma = jnp.abs(jax.random.normal(k_lrsig, (B,), jnp.float32)) + 0.1
    cross_cond = jax.random.normal(k_cc, (B, seq, cross_dim), jnp.float32)
    cross_cond_padding = jnp.zeros((B, seq), jnp.float32)
    pooler = jax.random.normal(k_pool, (B, pooler_dim), jnp.float32)

    out = noise_level_and_text_conditioned_upscaler_forward(
        params, x, sigma, low_res, low_res_sigma,
        (cross_cond, cross_cond_padding, pooler), sigma_data=sigma_data)
    jax.block_until_ready(out)

    # plain-JAX reference check
    c_in_ref = (1.0 / jnp.sqrt(low_res_sigma ** 2 + sigma_data ** 2))[:, None, None, None]
    up_ref = jnp.repeat(jnp.repeat(low_res, 2, axis=2), 2, axis=3) * c_in_ref
    c_noise = jnp.log1p(low_res_sigma)[:, None]
    f = 2.0 * math.pi * (c_noise @ fourier_weight.T)
    map_ref = jnp.concatenate([jnp.cos(f), jnp.sin(f), pooler], axis=1)

    assert out["unet_cond"].shape == (B, C, 2 * H, 2 * W)
    assert jnp.allclose(out["unet_cond"], up_ref, atol=1e-5, rtol=1e-5)
    assert jnp.allclose(out["mapping_cond"], map_ref, atol=1e-5, rtol=1e-5)

    print("KERNEL_OK")
</pallas_src>

<mosaic_0001>
module attributes {stable_mosaic.version = 11 : i64} {
  func.func @_upsample2x_scale_kernel(%arg0: i32, %arg1: i32, %arg2: memref<2xf32, #tpu.memory_space<smem>>, %arg3: memref<1x64x16xf32, #tpu.memory_space<vmem>>, %arg4: memref<1x64x64xf32, #tpu.memory_space<vmem>>) attributes {dimension_semantics = [#tpu.dimension_semantics<parallel>, #tpu.dimension_semantics<parallel>], iteration_bounds = array<i64: 2, 1>, scalar_prefetch = 0 : i64, scratch_operands = 0 : i64, tpu.core_type = #tpu.core_type<tc>, window_params = [{transform_indices = @transform_0, window_bounds = array<i64: 2>}, {transform_indices = @transform_1, window_bounds = array<i64: 1, 64, 16>}, {transform_indices = @transform_2, window_bounds = array<i64: 1, 64, 64>}]} {
    %c0 = arith.constant 0 : index
    %c0_0 = arith.constant 0 : index
    %c0_1 = arith.constant 0 : index
    %0 = vector.load %arg3[%c0, %c0_0, %c0_1] : memref<1x64x16xf32, #tpu.memory_space<vmem>>, vector<1x64x16xf32>
    %1 = vector.shape_cast %0 : vector<1x64x16xf32> to vector<64x16xf32>
    %2 = arith.index_cast %arg0 : i32 to index
    %3 = memref.load %arg2[%2] : memref<2xf32, #tpu.memory_space<smem>>
    %4 = vector.broadcast %3 : f32 to vector<64x16xf32>
    %5 = arith.mulf %1, %4 : vector<64x16xf32>
    %6 = tpu.iota {dimensions = array<i32: 0>} : vector<16x32xi32>
    %7 = tpu.iota {dimensions = array<i32: 1>} : vector<16x32xi32>
    %c1_i32 = arith.constant 1 : i32
    %8 = vector.broadcast %c1_i32 : i32 to vector<16x32xi32>
    %9 = arith.shrsi %7, %8 : vector<16x32xi32>
    %10 = arith.cmpi eq, %6, %9 : vector<16x32xi32>
    %11 = arith.extui %10 : vector<16x32xi1> to vector<16x32xi32>
    %12 = arith.sitofp %11 : vector<16x32xi32> to vector<16x32xf32>
    %cst = arith.constant dense<0.000000e+00> : vector<64x32xf32>
    %13 = tpu.matmul %5, %12, %cst {dimension_numbers = #tpu.dot_dimension_numbers<[1], [0], [0], [1], [0, 0, 1, 1], [], []>, precision = #tpu.contract_precision<fp32>} : vector<64x16xf32>, vector<16x32xf32>, vector<64x32xf32> -> vector<64x32xf32>
    %c0_2 = arith.constant 0 : index
    %c0_3 = arith.constant 0 : index
    %c0_4 = arith.constant 0 : index
    %14 = vector.load %arg4[%c0_2, %c0_3, %c0_4] : memref<1x64x64xf32, #tpu.memory_space<vmem>>, vector<1x64x32xf32>
    %15 = vector.shape_cast %14 : vector<1x64x32xf32> to vector<64x32xf32>
    %16 = vector.shape_cast %13 : vector<64x32xf32> to vector<1x64x32xf32>
    tpu.vector_store %arg4[%c0_2, %c0_3, %c0_4], %16 {strides = array<i32>} : memref<1x64x64xf32, #tpu.memory_space<vmem>>, vector<1x64x32xf32>,
    %c0_5 = arith.constant 0 : index
    %c0_6 = arith.constant 0 : index
    %c32 = arith.constant 32 : index
    %17 = vector.load %arg4[%c0_5, %c0_6, %c32] : memref<1x64x64xf32, #tpu.memory_space<vmem>>, vector<1x64x32xf32>
    %18 = vector.shape_cast %17 : vector<1x64x32xf32> to vector<64x32xf32>
    %19 = vector.shape_cast %13 : vector<64x32xf32> to vector<1x64x32xf32>
    tpu.vector_store %arg4[%c0_5, %c0_6, %c32], %19 {strides = array<i32>} : memref<1x64x64xf32, #tpu.memory_space<vmem>>, vector<1x64x32xf32>,
    return
  }
  func.func @transform_0(%arg0: i32, %arg1: i32) -> i32 {
    %c0_i32 = arith.constant 0 : i32
    %c0_i32_0 = arith.constant 0 : i32
    return %c0_i32 : i32
  }
  func.func @transform_1(%arg0: i32, %arg1: i32) -> (i32, i32, i32) {
    %c0_i32 = arith.constant 0 : i32
    %c0_i32_0 = arith.constant 0 : i32
    return %arg0, %arg1, %c0_i32 : i32, i32, i32
  }
  func.func @transform_2(%arg0: i32, %arg1: i32) -> (i32, i32, i32) {
    %c0_i32 = arith.constant 0 : i32
    %c0_i32_0 = arith.constant 0 : i32
    return %arg0, %arg1, %c0_i32 : i32, i32, i32
  }
}

</mosaic_0001>

<llo_original>
// kernel: tpu_custom_call.1
$region0: #{tpu_custom_call.1}
  #allocation0 [shape = 'u32[]', space=smem, size = 0x4, offset = 0x4, fixed_abs, tag = 'smem constant byte address 0x4 - core index']
  #allocation1 [shape = 'u32[144,128]{1,0:T(1,128)}', space=vmem, size = 0x12000, scoped, tag = 'internal scratch']
  %s0 = inlined_call_operand.vmem [shape: f32[2], index: 0, kind: input, shape index: {}]
  %s1 = inlined_call_operand.vmem [shape: f32[2,64,16], index: 1, kind: input, shape index: {}]
  %s2 = inlined_call_operand.hbm [shape: f32[2,64,64], index: 2, kind: output, shape index: {}]
  %s3 = sld [smem:[#allocation0]]
  $region45: #{tpu_custom_call.1} parent=0
    _
  %s5 = ssub.s32 1, %s3
  %s6 = scalar_select 0, %s5, %s3
  $region1: #{tpu_custom_call.1} parent=0
    #allocation2 [shape = 'u8[512]{0}', space=smem, size = 0x200, scoped, tag = 'input window, operand 0, single buffered']
    #allocation3 [shape = 's32[2]{0}', space=sflag, size = 0x8, scoped, tag = 'scoped memory for tpu_custom_call.1']
    #allocation4 [shape = 's32[2]{0}', space=sflag, size = 0x8, scoped, tag = 'scoped memory for tpu_custom_call.1']
    #allocation5 [shape = 'u8[65536]{0}', space=vmem, size = 0x10000, scoped, tag = 'output window, operand 0']
    %7 = vsyncpa [#allocation4], 0
    %8 = vsyncpa [#allocation3], 0
    %s9 = scalar_lea.sflag [#allocation3], 1
    %10 = vsyncpa %s9, 0
    loop: start=0, step=1, limit=4
    $region2: #{tpu_custom_call.1} parent=1 // loop_pre_header
      _
    $region3: #{tpu_custom_call.1} parent=1 // loop_header
      %s12 = sphi 0, %s16
      %p13 = scmp.ge.s32.totalorder %s12, 4
      %s19 = sphi 0, %s31
      %s20 = sphi 0, %s27
      %s21 = sphi 0, %s19
      %s22 = sphi 0, %s20
      %s23 = sphi 0, %s21
      %s24 = sphi 0, %s22
      %s32 = sphi 0, %s32
      %s34 = sphi 0, %s32
      %s35 = sphi 0, %s34
      %s49 = sphi 0, %s35
      %s57 = sphi 0, %s59
      %s60 = sphi 0, %s57
      %s61 = sphi 0, %s60
      %s77 = sphi 0, %s61
      %s85 = sphi 0, %s87
      %s88 = sphi 0, %s85
      %s89 = sphi 0, %s88
      %s105 = sphi 0, %s89
    $region4: #{tpu_custom_call.1} parent=1 // loop_header_branch
      %15 = sbr.rel (%p13) target = $region8
    $region5: #{tpu_custom_call.1} parent=1 // loop_body
      %s17 = ssub.s32 %s12, 1
      %s18 = ssub.s32 %s12, 2
      %s25 = sadd.s32 1, %s20
      %p26 = scmp.ge.s32.totalorder %s25, 1
      %s27 = scalar_select %p26, 0, %s25
      %s28 = sadd.s32 1, %s19
      %s29 = scalar_select %p26, %s28, %s19
      %p30 = scmp.ge.s32.totalorder %s29, 2
      %s31 = scalar_select %p30, 0, %s29
      %s33 = sadd.s32 %s32, 1
      %p36 = scmp.eq.s32.totalorder %s12, 1
      %p37 = scmp.ne.s32.totalorder %s32, %s34
      %p38 = scmp.eq.s32.totalorder %s12, 0
      %p39 = por %p37, %p38
      %p40 = scmp.ne.s32.totalorder %s32, %s34
      %p41 = scmp.eq.s32.totalorder %s17, 1
      %p42 = por %p40, %p41
      %p43 = scmp.ne.s32.totalorder %s34, %s35
      %p44 = scmp.eq.s32.totalorder %s17, 0
      %p45 = por %p43, %p44
      %p46 = scmp.ne.s32.totalorder %s34, %s35
      %p47 = scmp.eq.s32.totalorder %s18, 1
      %p48 = por %p46, %p47
      %p50 = scmp.ne.s32.totalorder %s35, %s49
      %p51 = scmp.eq.s32.totalorder %s18, 0
      %p52 = por %p50, %p51
      %s53 = ssub.s32 %s19, %s31
      %s54 = ssub.s32 %s20, %s27
      %s55 = sor.u32 %s53, %s54
      %p56 = scmp.eq.s32.totalorder %s55, 0
      %s58 = sadd.s32 %s57, 1
      %s59 = scalar_select %p56, %s57, %s58
      %p62 = pneg %p56
      %p63 = scmp.eq.s32.totalorder %s12, 1
      %p64 = por %p62, %p63
      %p65 = scmp.ne.s32.totalorder %s57, %s60
      %p66 = scmp.eq.s32.totalorder %s12, 0
      %p67 = por %p65, %p66
      %p68 = scmp.ne.s32.totalorder %s57, %s60
      %p69 = scmp.eq.s32.totalorder %s17, 1
      %p70 = por %p68, %p69
      %p71 = scmp.ne.s32.totalorder %s60, %s61
      %p72 = scmp.eq.s32.totalorder %s17, 0
      %p73 = por %p71, %p72
      %p74 = scmp.ne.s32.totalorder %s60, %s61
      %p75 = scmp.eq.s32.totalorder %s18, 1
      %p76 = por %p74, %p75
      %p78 = scmp.ne.s32.totalorder %s61, %s77
      %p79 = scmp.eq.s32.totalorder %s18, 0
      %p80 = por %p78, %p79
      %s81 = ssub.s32 %s19, %s31
      %s82 = ssub.s32 %s20, %s27
      %s83 = sor.u32 %s81, %s82
      %p84 = scmp.eq.s32.totalorder %s83, 0
      %s86 = sadd.s32 %s85, 1
      %s87 = scalar_select %p84, %s85, %s86
      %p90 = pneg %p84
      %p91 = scmp.eq.s32.totalorder %s12, 1
      %p92 = por %p90, %p91
      %p93 = scmp.ne.s32.totalorder %s85, %s88
      %p94 = scmp.eq.s32.totalorder %s12, 0
      %p95 = por %p93, %p94
      %p96 = scmp.ne.s32.totalorder %s85, %s88
      %p97 = scmp.eq.s32.totalorder %s17, 1
      %p98 = por %p96, %p97
      %p99 = scmp.ne.s32.totalorder %s88, %s89
      %p100 = scmp.eq.s32.totalorder %s17, 0
      %p101 = por %p99, %p100
      %p102 = scmp.ne.s32.totalorder %s88, %s89
      %p103 = scmp.eq.s32.totalorder %s18, 1
      %p104 = por %p102, %p103
      %p106 = scmp.ne.s32.totalorder %s89, %s105
      %p107 = scmp.eq.s32.totalorder %s18, 0
      %p108 = por %p106, %p107
      %p109 = scmp.le.s32.totalorder 1, %s12
      %p110 = scmp.lt.s32.totalorder %s12, 3
      %p111 = pnand %p109, %p110
      %p112 = pneg %p111
      // Predicated region
      $region9: #{tpu_custom_call.1} parent=5 // pred_check
        _
      $region10: #{tpu_custom_call.1} parent=5 // pred_check_branch
        %114 = sbr.rel (%p111) target = $region12
      $region11: #{tpu_custom_call.1} parent=5 // pred_region
        %s115 = ssub.s32 %s12, 1
        // Predicated region
        $region13: #{tpu_custom_call.1} parent=11 // pred_check
          %p116 = pneg %p45
        $region14: #{tpu_custom_call.1} parent=11 // pred_check_branch
          %118 = sbr.rel (%p116) target = $region16
        $region15: #{tpu_custom_call.1} parent=11 // pred_region
          %s120 = ssub.s32 16, 16
          %121 = vsyncadd [#allocation4], %s120
          %s123 = sshll.u32 %s0, 4
          %s124 = int_to_ptr.vmem [resolvable:$true] %s123
          %126 = dma.vmem_to_smem %s124, 16, [#allocation2], [#allocation4]
        $region16: #{tpu_custom_call.1} parent=11 // pred_fallthru
          _
      $region12: #{tpu_custom_call.1} parent=5 // pred_fallthru
        _
      %p127 = scmp.lt.s32.totalorder %s12, 2
      // Predicated region
      $region17: #{tpu_custom_call.1} parent=5 // pred_check
        %p128 = pneg %p127
      $region18: #{tpu_custom_call.1} parent=5 // pred_check_branch
        %130 = sbr.rel (%p128) target = $region20
      $region19: #{tpu_custom_call.1} parent=5 // pred_region
        // Predicated region
        $region21: #{tpu_custom_call.1} parent=19 // pred_check
          %p131 = pneg %p67
        $region22: #{tpu_custom_call.1} parent=19 // pred_check_branch
          %133 = sbr.rel (%p131) target = $region24
        $region23: #{tpu_custom_call.1} parent=19 // pred_region
          %s134 = smul.u32 8, %s20
          %p135 = scmp.lt.s32.totalorder %s19, 1
          %s136 = scalar_select %p135, %s19, 1
          %p137 = scmp.lt.s32.totalorder %s134, 7
          %s138 = scalar_select %p137, %s134, 7
          %s139 = smul.addr %s136, 8
          %s140 = sadd.s32 %s138, %s139
          %s141 = smul.addr %s140, 8
          %s142 = scalar_lea.vmem %s1, %s141
          %s143 = smul.u32 8, %s20
        $region24: #{tpu_custom_call.1} parent=19 // pred_fallthru
          _
      $region20: #{tpu_custom_call.1} parent=5 // pred_fallthru
        _
      %p144 = scmp.le.s32.totalorder 1, %s12
      %p145 = scmp.lt.s32.totalorder %s12, 3
      %p146 = pnand %p144, %p145
      %p147 = pneg %p146
      // Predicated region
      $region25: #{tpu_custom_call.1} parent=5 // pred_check
        _
      $region26: #{tpu_custom_call.1} parent=5 // pred_check_branch
        %149 = sbr.rel (%p146) target = $region28
      $region27: #{tpu_custom_call.1} parent=5 // pred_region
        %s150 = ssub.s32 %s12, 1
        // Predicated region
        $region29: #{tpu_custom_call.1} parent=27 // pred_check
          %p151 = pneg %p45
        $region30: #{tpu_custom_call.1} parent=27 // pred_check_branch
          %153 = sbr.rel (%p151) target = $region32
        $region31: #{tpu_custom_call.1} parent=27 // pred_region
          %154 = dma.done [#allocation4], 16
        $region32: #{tpu_custom_call.1} parent=27 // pred_fallthru
          _
        %155 = sfence
        %p156 = pneg %p45
        %p157 = pneg %p42
        %s158 = smul.u32 8, %s22
        %p159 = scmp.lt.s32.totalorder %s21, 1
        %s160 = scalar_select %p159, %s21, 1
        %p161 = scmp.lt.s32.totalorder %s158, 7
        %s162 = scalar_select %p161, %s158, 7
        %s163 = smul.addr %s160, 8
        %s164 = sadd.s32 %s162, %s163
        %s165 = smul.addr %s164, 8
        %s166 = scalar_lea.vmem %s1, %s165
        %p167 = pneg %p73
        %p168 = pneg %p70
        %p169 = pneg %p101
        %p170 = pneg %p98
        %s171 = sand.u32 %s88, 1
        %s172 = scalar_lea.sflag [#allocation3], %s171
        %s173 = sand.u32 %s88, 1
        %s174 = smul.addr %s173, 64
        %s175 = scalar_lea.vmem [#allocation5], %s174
        %s176 = smul.u32 8, %s22
        %p177 = scmp.lt.s32.totalorder %s21, 1
        %s178 = scalar_select %p177, %s21, 1
        %p179 = scmp.lt.s32.totalorder %s176, 7
        %s180 = scalar_select %p179, %s176, 7
        %s181 = smul.addr %s178, 8
        %s182 = sadd.s32 %s180, %s181
        %s183 = smul.addr %s182, 8
        %s184 = scalar_lea.vmem %s1, %s183
        %s185 = smul.u32 8, %s22
        %s186 = smul.u32 8, %s22
        %v187 = vld [vmem:[%s184] sm:$0xff]
        %v188 = vld [vmem:[%s184 + $0x8] sm:$0xff]
        %v189 = vld [vmem:[%s184 + $0x10] sm:$0xff]
        %v190 = vld [vmem:[%s184 + $0x18] sm:$0xff]
        %v191 = vld [vmem:[%s184 + $0x20] sm:$0xff]
        %v192 = vld [vmem:[%s184 + $0x28] sm:$0xff]
        %v193 = vld [vmem:[%s184 + $0x30] sm:$0xff]
        %v194 = vld [vmem:[%s184 + $0x38] sm:$0xff]
        %s195 = sld [smem:[#allocation2 + %s21]]
        %v196 = vstv %s195
        %v197 = vmul.f32 %v187, %v196
        %v198 = vmul.f32 %v188, %v196
        %v199 = vmul.f32 %v189, %v196
        %v200 = vmul.f32 %v190, %v196
        %v201 = vmul.f32 %v191, %v196
        %v202 = vmul.f32 %v192, %v196
        %v203 = vmul.f32 %v193, %v196
        %v204 = vmul.f32 %v194, %v196
        %v205 = vlaneseq
        %v206 = vshrl.u32 %v205, 7
        %v207 = vadd.s32 %v206, 8
        %v208 = vlaneseq
        %v209 = vand.u32 %v208, 127
        %v210 = vshra.s32 %v209, 1
        %vm211 = vcmp.eq.s32.totalorder %v206, %v210
        %vm212 = vcmp.eq.s32.totalorder %v207, %v210
        %v213 = vsel %vm211, 1, 0
        %v214 = vsel %vm212, 1, 0
        %v215 = vcvt.s32.f32 %v213
        %v216 = vcvt.s32.f32 %v214
        %vm217 = vcmask 130048
        %v219 = vsel %vm217, %v197, 0
        %v222 = vsel %vm217, %v198, 0
        %v225 = vsel %vm217, %v199, 0
        %v228 = vsel %vm217, %v200, 0
        %v231 = vsel %vm217, %v201, 0
        %v234 = vsel %vm217, %v202, 0
        %v237 = vsel %vm217, %v203, 0
        %v240 = vsel %vm217, %v204, 0
        %242 = vmatprep.subr.mxu0 0.0
        %v243 = vand.u32 %v215, 4294901760
        %244 = vmatpush1.msra.mxu0 %v243
        %245 = vmatprep.subr.mxu0 0.0
        %v246 = vand.u32 %v216, 4294901760
        %247 = vmatpush1.msra.mxu0 %v246
        %248 = vmatprep.subr.mxu0 0.0
        %249 = vmatpush1.msra.mxu0 0.0
        %250 = vmatprep.subr.mxu0 0.0
        %251 = vmatpush1.msra.mxu0 0.0
        %252 = vmatprep.subr.mxu0 0.0
        %253 = vmatpush1.msra.mxu0 0.0
        %254 = vmatprep.subr.mxu0 0.0
        %255 = vmatpush1.msra.mxu0 0.0
        %256 = vmatprep.subr.mxu0 0.0
        %257 = vmatpush1.msra.mxu0 0.0
        %258 = vmatprep.subr.mxu0 0.0
        %259 = vmatpush1.msra.mxu0 0.0
        %260 = vmatprep.subr.mxu0 0.0
        %261 = vmatpush1.msra.mxu0 0.0
        %262 = vmatprep.subr.mxu0 0.0
        %263 = vmatpush1.msra.mxu0 0.0
        %264 = vmatprep.subr.mxu0 0.0
        %265 = vmatpush1.msra.mxu0 0.0
        %266 = vmatprep.subr.mxu0 0.0
        %267 = vmatpush1.msra.mxu0 0.0
        %268 = vmatprep.subr.mxu0 0.0
        %269 = vmatpush1.msra.mxu0 0.0
        %270 = vmatprep.subr.mxu0 0.0
        %271 = vmatpush1.msra.mxu0 0.0
        %272 = vmatprep.subr.mxu0 0.0
        %273 = vmatpush1.msra.mxu0 0.0
        %274 = vmatprep.subr.mxu0 0.0
        %275 = vmatpush1.msra.mxu0 0.0
        %276 = vmatprep.subr.mxu0 0.0
        %277 = vmatpush1.msra.mxu0 0.0
        %278 = vmatprep.subr.mxu0 0.0
        %279 = vmatpush1.msra.mxu0 0.0
        %280 = vmatprep.subr.mxu0 0.0
        %281 = vmatpush1.msra.mxu0 0.0
        %282 = vmatprep.subr.mxu0 0.0
        %283 = vmatpush1.msra.mxu0 0.0
        %284 = vmatprep.subr.mxu0 0.0
        %285 = vmatpush1.msra.mxu0 0.0
        %286 = vmatprep.subr.mxu0 0.0
        %287 = vmatpush1.msra.mxu0 0.0
        %288 = vmatprep.subr.mxu0 0.0
        %289 = vmatpush1.msra.mxu0 0.0
        %290 = vmatprep.subr.mxu0 0.0
        %291 = vmatpush1.msra.mxu0 0.0
        %292 = vmatprep.subr.mxu0 0.0
        %293 = vmatpush1.msra.mxu0 0.0
        %294 = vmatprep.subr.mxu0 0.0
        %295 = vmatpush1.msra.mxu0 0.0
        %296 = vmatprep.subr.mxu0 0.0
        %297 = vmatpush1.msra.mxu0 0.0
        %298 = vmatprep.subr.mxu0 0.0
        %299 = vmatpush1.msra.mxu0 0.0
        %300 = vmatprep.subr.mxu0 0.0
        %301 = vmatpush1.msra.mxu0 0.0
        %302 = vmatprep.subr.mxu0 0.0
        %303 = vmatpush1.msra.mxu0 0.0
        %304 = vmatprep.subr.mxu0 0.0
        %305 = vmatpush1.msra.mxu0 0.0
        %306 = vmatprep.subr.mxu0 0.0
        %307 = vmatpush1.msra.mxu0 0.0
        %308 = vmatprep.mubr.f32.mxu0 0.0
        %v309 = vand.u32 %v219, 4294901760
        %v310 = vsub.f32 %v219, %v309
        %v311 = vand.u32 %v310, 4294901760
        %v312 = vsub.f32 %v310, %v311
        %v313 = vand.u32 %v312, 4294901760
        %314 = vmatmul.mubr.f32.gmra.mrb[0].mxu0 %v313
        %v315 = vpop.f32.mrb[0].mxu0
        %v316 = vadd.f32 0.0, %v315
        %v317 = vpop.f32.mrb[0].mxu0
        %318 = vmatprep.mubr.f32.mxu0 0.0
        %v319 = vand.u32 %v222, 4294901760
        %v320 = vsub.f32 %v222, %v319
        %v321 = vand.u32 %v320, 4294901760
        %v322 = vsub.f32 %v320, %v321
        %v323 = vand.u32 %v322, 4294901760
        %324 = vmatmul.mubr.f32.gmra.mrb[0].mxu0 %v323
        %v325 = vpop.f32.mrb[0].mxu0
        %v326 = vadd.f32 0.0, %v325
        %v327 = vpop.f32.mrb[0].mxu0
        %328 = vmatprep.mubr.f32.mxu0 0.0
        %v329 = vand.u32 %v225, 4294901760
        %v330 = vsub.f32 %v225, %v329
        %v331 = vand.u32 %v330, 4294901760
        %v332 = vsub.f32 %v330, %v331
        %v333 = vand.u32 %v332, 4294901760
        %334 = vmatmul.mubr.f32.gmra.mrb[0].mxu0 %v333
        %v335 = vpop.f32.mrb[0].mxu0
        %v336 = vadd.f32 0.0, %v335
        %v337 = vpop.f32.mrb[0].mxu0
        %338 = vmatprep.mubr.f32.mxu0 0.0
        %v339 = vand.u32 %v228, 4294901760
        %v340 = vsub.f32 %v228, %v339
        %v341 = vand.u32 %v340, 4294901760
        %v342 = vsub.f32 %v340, %v341
        %v343 = vand.u32 %v342, 4294901760
        %344 = vmatmul.mubr.f32.gmra.mrb[0].mxu0 %v343
        %v345 = vpop.f32.mrb[0].mxu0
        %v346 = vadd.f32 0.0, %v345
        %v347 = vpop.f32.mrb[0].mxu0
        %348 = vmatprep.mubr.f32.mxu0 0.0
        %v349 = vand.u32 %v231, 4294901760
        %v350 = vsub.f32 %v231, %v349
        %v351 = vand.u32 %v350, 4294901760
        %v352 = vsub.f32 %v350, %v351
        %v353 = vand.u32 %v352, 4294901760
        %354 = vmatmul.mubr.f32.gmra.mrb[0].mxu0 %v353
        %v355 = vpop.f32.mrb[0].mxu0
        %v356 = vadd.f32 0.0, %v355
        %v357 = vpop.f32.mrb[0].mxu0
        %358 = vmatprep.mubr.f32.mxu0 0.0
        %v359 = vand.u32 %v234, 4294901760
        %v360 = vsub.f32 %v234, %v359
        %v361 = vand.u32 %v360, 4294901760
        %v362 = vsub.f32 %v360, %v361
        %v363 = vand.u32 %v362, 4294901760
        %364 = vmatmul.mubr.f32.gmra.mrb[0].mxu0 %v363
        %v365 = vpop.f32.mrb[0].mxu0
        %v366 = vadd.f32 0.0, %v365
        %v367 = vpop.f32.mrb[0].mxu0
        %368 = vmatprep.mubr.f32.mxu0 0.0
        %v369 = vand.u32 %v237, 4294901760
        %v370 = vsub.f32 %v237, %v369
        %v371 = vand.u32 %v370, 4294901760
        %v372 = vsub.f32 %v370, %v371
        %v373 = vand.u32 %v372, 4294901760
        %374 = vmatmul.mubr.f32.gmra.mrb[0].mxu0 %v373
        %v375 = vpop.f32.mrb[0].mxu0
        %v376 = vadd.f32 0.0, %v375
        %v377 = vpop.f32.mrb[0].mxu0
        %378 = vmatprep.mubr.f32.mxu0 0.0
        %v379 = vand.u32 %v240, 4294901760
        %v380 = vsub.f32 %v240, %v379
        %v381 = vand.u32 %v380, 4294901760
        %v382 = vsub.f32 %v380, %v381
        %v383 = vand.u32 %v382, 4294901760
        %384 = vmatmul.mubr.f32.gmra.mrb[0].mxu0 %v383
        %v385 = vpop.f32.mrb[0].mxu0
        %v386 = vadd.f32 0.0, %v385
        %v387 = vpop.f32.mrb[0].mxu0
        %388 = vdwg.mxu0
        %389 = vmatprep.subr.mxu0 0.0
        %v390 = vand.u32 %v215, 4294901760
        %v391 = vsub.f32 %v215, %v390
        %v392 = vand.u32 %v391, 4294901760
        %v393 = vsub.f32 %v391, %v392
        %v394 = vand.u32 %v393, 4294901760
        %395 = vmatpush1.msra.mxu0 %v394
        %396 = vmatprep.subr.mxu0 0.0
        %v397 = vand.u32 %v216, 4294901760
        %v398 = vsub.f32 %v216, %v397
        %v399 = vand.u32 %v398, 4294901760
        %v400 = vsub.f32 %v398, %v399
        %v401 = vand.u32 %v400, 4294901760
        %402 = vmatpush1.msra.mxu0 %v401
        %403 = vmatprep.subr.mxu0 0.0
        %404 = vmatpush1.msra.mxu0 0.0
        %405 = vmatprep.subr.mxu0 0.0
        %406 = vmatpush1.msra.mxu0 0.0
        %407 = vmatprep.subr.mxu0 0.0
        %408 = vmatpush1.msra.mxu0 0.0
        %409 = vmatprep.subr.mxu0 0.0
        %410 = vmatpush1.msra.mxu0 0.0
        %411 = vmatprep.subr.mxu0 0.0
        %412 = vmatpush1.msra.mxu0 0.0
        %413 = vmatprep.subr.mxu0 0.0
        %414 = vmatpush1.msra.mxu0 0.0
        %415 = vmatprep.subr.mxu0 0.0
        %416 = vmatpush1.msra.mxu0 0.0
        %417 = vmatprep.subr.mxu0 0.0
        %418 = vmatpush1.msra.mxu0 0.0
        %419 = vmatprep.subr.mxu0 0.0
        %420 = vmatpush1.msra.mxu0 0.0
        %421 = vmatprep.subr.mxu0 0.0
        %422 = vmatpush1.msra.mxu0 0.0
        %423 = vmatprep.subr.mxu0 0.0
        %424 = vmatpush1.msra.mxu0 0.0
        %425 = vmatprep.subr.mxu0 0.0
        %426 = vmatpush1.msra.mxu0 0.0
        %427 = vmatprep.subr.mxu0 0.0
        %428 = vmatpush1.msra.mxu0 0.0
        %429 = vmatprep.subr.mxu0 0.0
        %430 = vmatpush1.msra.mxu0 0.0
        %431 = vmatprep.subr.mxu0 0.0
        %432 = vmatpush1.msra.mxu0 0.0
        %433 = vmatprep.subr.mxu0 0.0
        %434 = vmatpush1.msra.mxu0 0.0
        %435 = vmatprep.subr.mxu0 0.0
        %436 = vmatpush1.msra.mxu0 0.0
        %437 = vmatprep.subr.mxu0 0.0
        %438 = vmatpush1.msra.mxu0 0.0
        %439 = vmatprep.subr.mxu0 0.0
        %440 = vmatpush1.msra.mxu0 0.0
        %441 = vmatprep.subr.mxu0 0.0
        %442 = vmatpush1.msra.mxu0 0.0
        %443 = vmatprep.subr.mxu0 0.0
        %444 = vmatpush1.msra.mxu0 0.0
        %445 = vmatprep.subr.mxu0 0.0
        %446 = vmatpush1.msra.mxu0 0.0
        %447 = vmatprep.subr.mxu0 0.0
        %448 = vmatpush1.msra.mxu0 0.0
        %449 = vmatprep.subr.mxu0 0.0
        %450 = vmatpush1.msra.mxu0 0.0
        %451 = vmatprep.subr.mxu0 0.0
        %452 = vmatpush1.msra.mxu0 0.0
        %453 = vmatprep.subr.mxu0 0.0
        %454 = vmatpush1.msra.mxu0 0.0
        %455 = vmatprep.subr.mxu0 0.0
        %456 = vmatpush1.msra.mxu0 0.0
        %457 = vmatprep.subr.mxu0 0.0
        %458 = vmatpush1.msra.mxu0 0.0
        %459 = vmatprep.subr.mxu0 0.0
        %460 = vmatpush1.msra.mxu0 0.0
        %461 = vmatprep.subr.mxu0 0.0
        %462 = vmatpush1.msra.mxu0 0.0
        %463 = vmatprep.mubr.f32.mxu0 0.0
        %v464 = vand.u32 %v219, 4294901760
        %465 = vmatmul.mubr.f32.gmra.mrb[0].mxu0 %v464
        %v466 = vpop.f32.mrb[0].mxu0
        %v467 = vadd.f32 %v316, %v466
        %v468 = vpop.f32.mrb[0].mxu0
        %469 = vmatprep.mubr.f32.mxu0 0.0
        %v470 = vand.u32 %v222, 4294901760
        %471 = vmatmul.mubr.f32.gmra.mrb[0].mxu0 %v470
        %v472 = vpop.f32.mrb[0].mxu0
        %v473 = vadd.f32 %v326, %v472
        %v474 = vpop.f32.mrb[0].mxu0
        %475 = vmatprep.mubr.f32.mxu0 0.0
        %v476 = vand.u32 %v225, 4294901760
        %477 = vmatmul.mubr.f32.gmra.mrb[0].mxu0 %v476
        %v478 = vpop.f32.mrb[0].mxu0
        %v479 = vadd.f32 %v336, %v478
        %v480 = vpop.f32.mrb[0].mxu0
        %481 = vmatprep.mubr.f32.mxu0 0.0
        %v482 = vand.u32 %v228, 4294901760
        %483 = vmatmul.mubr.f32.gmra.mrb[0].mxu0 %v482
        %v484 = vpop.f32.mrb[0].mxu0
        %v485 = vadd.f32 %v346, %v484
        %v486 = vpop.f32.mrb[0].mxu0
        %487 = vmatprep.mubr.f32.mxu0 0.0
        %v488 = vand.u32 %v231, 4294901760
        %489 = vmatmul.mubr.f32.gmra.mrb[0].mxu0 %v488
        %v490 = vpop.f32.mrb[0].mxu0
        %v491 = vadd.f32 %v356, %v490
        %v492 = vpop.f32.mrb[0].mxu0
        %493 = vmatprep.mubr.f32.mxu0 0.0
        %v494 = vand.u32 %v234, 4294901760
        %495 = vmatmul.mubr.f32.gmra.mrb[0].mxu0 %v494
        %v496 = vpop.f32.mrb[0].mxu0
        %v497 = vadd.f32 %v366, %v496
        %v498 = vpop.f32.mrb[0].mxu0
        %499 = vmatprep.mubr.f32.mxu0 0.0
        %v500 = vand.u32 %v237, 4294901760
        %501 = vmatmul.mubr.f32.gmra.mrb[0].mxu0 %v500
        %v502 = vpop.f32.mrb[0].mxu0
        %v503 = vadd.f32 %v376, %v502
        %v504 = vpop.f32.mrb[0].mxu0
        %505 = vmatprep.mubr.f32.mxu0 0.0
        %v506 = vand.u32 %v240, 4294901760
        %507 = vmatmul.mubr.f32.gmra.mrb[0].mxu0 %v506
        %v508 = vpop.f32.mrb[0].mxu0
        %v509 = vadd.f32 %v386, %v508
        %v510 = vpop.f32.mrb[0].mxu0
        %511 = vdwg.mxu0
        %512 = vmatprep.subr.mxu0 0.0
        %v513 = vand.u32 %v215, 4294901760
        %v514 = vsub.f32 %v215, %v513
        %515 = vmatpush1.msra.mxu0 %v514
        %516 = vmatprep.subr.mxu0 0.0
        %v517 = vand.u32 %v216, 4294901760
        %v518 = vsub.f32 %v216, %v517
        %519 = vmatpush1.msra.mxu0 %v518
        %520 = vmatprep.subr.mxu0 0.0
        %521 = vmatpush1.msra.mxu0 0.0
        %522 = vmatprep.subr.mxu0 0.0
        %523 = vmatpush1.msra.mxu0 0.0
        %524 = vmatprep.subr.mxu0 0.0
        %525 = vmatpush1.msra.mxu0 0.0
        %526 = vmatprep.subr.mxu0 0.0
        %527 = vmatpush1.msra.mxu0 0.0
        %528 = vmatprep.subr.mxu0 0.0
        %529 = vmatpush1.msra.mxu0 0.0
        %530 = vmatprep.subr.mxu0 0.0
        %531 = vmatpush1.msra.mxu0 0.0
        %532 = vmatprep.subr.mxu0 0.0
        %533 = vmatpush1.msra.mxu0 0.0
        %534 = vmatprep.subr.mxu0 0.0
        %535 = vmatpush1.msra.mxu0 0.0
        %536 = vmatprep.subr.mxu0 0.0
        %537 = vmatpush1.msra.mxu0 0.0
        %538 = vmatprep.subr.mxu0 0.0
        %539 = vmatpush1.msra.mxu0 0.0
        %540 = vmatprep.subr.mxu0 0.0
        %541 = vmatpush1.msra.mxu0 0.0
        %542 = vmatprep.subr.mxu0 0.0
        %543 = vmatpush1.msra.mxu0 0.0
        %544 = vmatprep.subr.mxu0 0.0
        %545 = vmatpush1.msra.mxu0 0.0
        %546 = vmatprep.subr.mxu0 0.0
        %547 = vmatpush1.msra.mxu0 0.0
        %548 = vmatprep.subr.mxu0 0.0
        %549 = vmatpush1.msra.mxu0 0.0
        %550 = vmatprep.subr.mxu0 0.0
        %551 = vmatpush1.msra.mxu0 0.0
        %552 = vmatprep.subr.mxu0 0.0
        %553 = vmatpush1.msra.mxu0 0.0
        %554 = vmatprep.subr.mxu0 0.0
        %555 = vmatpush1.msra.mxu0 0.0
        %556 = vmatprep.subr.mxu0 0.0
        %557 = vmatpush1.msra.mxu0 0.0
        %558 = vmatprep.subr.mxu0 0.0
        %559 = vmatpush1.msra.mxu0 0.0
        %560 = vmatprep.subr.mxu0 0.0
        %561 = vmatpush1.msra.mxu0 0.0
        %562 = vmatprep.subr.mxu0 0.0
        %563 = vmatpush1.msra.mxu0 0.0
        %564 = vmatprep.subr.mxu0 0.0
        %565 = vmatpush1.msra.mxu0 0.0
        %566 = vmatprep.subr.mxu0 0.0
        %567 = vmatpush1.msra.mxu0 0.0
        %568 = vmatprep.subr.mxu0 0.0
        %569 = vmatpush1.msra.mxu0 0.0
        %570 = vmatprep.subr.mxu0 0.0
        %571 = vmatpush1.msra.mxu0 0.0
        %572 = vmatprep.subr.mxu0 0.0
        %573 = vmatpush1.msra.mxu0 0.0
        %574 = vmatprep.subr.mxu0 0.0
        %575 = vmatpush1.msra.mxu0 0.0
        %576 = vmatprep.subr.mxu0 0.0
        %577 = vmatpush1.msra.mxu0 0.0
        %578 = vmatprep.subr.mxu0 0.0
        %579 = vmatpush1.msra.mxu0 0.0
        %580 = vmatprep.mubr.f32.mxu0 0.0
        %v581 = vand.u32 %v219, 4294901760
        %v582 = vsub.f32 %v219, %v581
        %583 = vmatmul.mubr.f32.gmra.mrb[0].mxu0 %v582
        %v584 = vpop.f32.mrb[0].mxu0
        %v585 = vadd.f32 %v467, %v584
        %v586 = vpop.f32.mrb[0].mxu0
        %587 = vmatprep.mubr.f32.mxu0 0.0
        %v588 = vand.u32 %v222, 4294901760
        %v589 = vsub.f32 %v222, %v588
        %590 = vmatmul.mubr.f32.gmra.mrb[0].mxu0 %v589
        %v591 = vpop.f32.mrb[0].mxu0
        %v592 = vadd.f32 %v473, %v591
        %v593 = vpop.f32.mrb[0].mxu0
        %594 = vmatprep.mubr.f32.mxu0 0.0
        %v595 = vand.u32 %v225, 4294901760
        %v596 = vsub.f32 %v225, %v595
        %597 = vmatmul.mubr.f32.gmra.mrb[0].mxu0 %v596
        %v598 = vpop.f32.mrb[0].mxu0
        %v599 = vadd.f32 %v479, %v598
        %v600 = vpop.f32.mrb[0].mxu0
        %601 = vmatprep.mubr.f32.mxu0 0.0
        %v602 = vand.u32 %v228, 4294901760
        %v603 = vsub.f32 %v228, %v602
        %604 = vmatmul.mubr.f32.gmra.mrb[0].mxu0 %v603
        %v605 = vpop.f32.mrb[0].mxu0
        %v606 = vadd.f32 %v485, %v605
        %v607 = vpop.f32.mrb[0].mxu0
        %608 = vmatprep.mubr.f32.mxu0 0.0
        %v609 = vand.u32 %v231, 4294901760
        %v610 = vsub.f32 %v231, %v609
        %611 = vmatmul.mubr.f32.gmra.mrb[0].mxu0 %v610
        %v612 = vpop.f32.mrb[0].mxu0
        %v613 = vadd.f32 %v491, %v612
        %v614 = vpop.f32.mrb[0].mxu0
        %615 = vmatprep.mubr.f32.mxu0 0.0
        %v616 = vand.u32 %v234, 4294901760
        %v617 = vsub.f32 %v234, %v616
        %618 = vmatmul.mubr.f32.gmra.mrb[0].mxu0 %v617
        %v619 = vpop.f32.mrb[0].mxu0
        %v620 = vadd.f32 %v497, %v619
        %v621 = vpop.f32.mrb[0].mxu0
        %622 = vmatprep.mubr.f32.mxu0 0.0
        %v623 = vand.u32 %v237, 4294901760
        %v624 = vsub.f32 %v237, %v623
        %625 = vmatmul.mubr.f32.gmra.mrb[0].mxu0 %v624
        %v626 = vpop.f32.mrb[0].mxu0
        %v627 = vadd.f32 %v503, %v626
        %v628 = vpop.f32.mrb[0].mxu0
        %629 = vmatprep.mubr.f32.mxu0 0.0
        %v630 = vand.u32 %v240, 4294901760
        %v631 = vsub.f32 %v240, %v630
        %632 = vmatmul.mubr.f32.gmra.mrb[0].mxu0 %v631
        %v633 = vpop.f32.mrb[0].mxu0
        %v634 = vadd.f32 %v509, %v633
        %v635 = vpop.f32.mrb[0].mxu0
        %636 = vdwg.mxu0
        %637 = vmatprep.subr.mxu0 0.0
        %v638 = vand.u32 %v215, 4294901760
        %639 = vmatpush1.msra.mxu0 %v638
        %640 = vmatprep.subr.mxu0 0.0
        %v641 = vand.u32 %v216, 4294901760
        %642 = vmatpush1.msra.mxu0 %v641
        %643 = vmatprep.subr.mxu0 0.0
        %644 = vmatpush1.msra.mxu0 0.0
        %645 = vmatprep.subr.mxu0 0.0
        %646 = vmatpush1.msra.mxu0 0.0
        %647 = vmatprep.subr.mxu0 0.0
        %648 = vmatpush1.msra.mxu0 0.0
        %649 = vmatprep.subr.mxu0 0.0
        %650 = vmatpush1.msra.mxu0 0.0
        %651 = vmatprep.subr.mxu0 0.0
        %652 = vmatpush1.msra.mxu0 0.0
        %653 = vmatprep.subr.mxu0 0.0
        %654 = vmatpush1.msra.mxu0 0.0
        %655 = vmatprep.subr.mxu0 0.0
        %656 = vmatpush1.msra.mxu0 0.0
        %657 = vmatprep.subr.mxu0 0.0
        %658 = vmatpush1.msra.mxu0 0.0
        %659 = vmatprep.subr.mxu0 0.0
        %660 = vmatpush1.msra.mxu0 0.0
        %661 = vmatprep.subr.mxu0 0.0
        %662 = vmatpush1.msra.mxu0 0.0
        %663 = vmatprep.subr.mxu0 0.0
        %664 = vmatpush1.msra.mxu0 0.0
        %665 = vmatprep.subr.mxu0 0.0
        %666 = vmatpush1.msra.mxu0 0.0
        %667 = vmatprep.subr.mxu0 0.0
        %668 = vmatpush1.msra.mxu0 0.0
        %669 = vmatprep.subr.mxu0 0.0
        %670 = vmatpush1.msra.mxu0 0.0
        %671 = vmatprep.subr.mxu0 0.0
        %672 = vmatpush1.msra.mxu0 0.0
        %673 = vmatprep.subr.mxu0 0.0
        %674 = vmatpush1.msra.mxu0 0.0
        %675 = vmatprep.subr.mxu0 0.0
        %676 = vmatpush1.msra.mxu0 0.0
        %677 = vmatprep.subr.mxu0 0.0
        %678 = vmatpush1.msra.mxu0 0.0
        %679 = vmatprep.subr.mxu0 0.0
        %680 = vmatpush1.msra.mxu0 0.0
        %681 = vmatprep.subr.mxu0 0.0
        %682 = vmatpush1.msra.mxu0 0.0
        %683 = vmatprep.subr.mxu0 0.0
        %684 = vmatpush1.msra.mxu0 0.0
        %685 = vmatprep.subr.mxu0 0.0
        %686 = vmatpush1.msra.mxu0 0.0
        %687 = vmatprep.subr.mxu0 0.0
        %688 = vmatpush1.msra.mxu0 0.0
        %689 = vmatprep.subr.mxu0 0.0
        %690 = vmatpush1.msra.mxu0 0.0
        %691 = vmatprep.subr.mxu0 0.0
        %692 = vmatpush1.msra.mxu0 0.0
        %693 = vmatprep.subr.mxu0 0.0
        %694 = vmatpush1.msra.mxu0 0.0
        %695 = vmatprep.subr.mxu0 0.0
        %696 = vmatpush1.msra.mxu0 0.0
        %697 = vmatprep.subr.mxu0 0.0
        %698 = vmatpush1.msra.mxu0 0.0
        %699 = vmatprep.subr.mxu0 0.0
        %700 = vmatpush1.msra.mxu0 0.0
        %701 = vmatprep.subr.mxu0 0.0
        %702 = vmatpush1.msra.mxu0 0.0
        %703 = vmatprep.mubr.f32.mxu0 0.0
        %v704 = vand.u32 %v219, 4294901760
        %v705 = vsub.f32 %v219, %v704
        %v706 = vand.u32 %v705, 4294901760
        %707 = vmatmul.mubr.f32.gmra.mrb[0].mxu0 %v706
        %v708 = vpop.f32.mrb[0].mxu0
        %v709 = vadd.f32 %v585, %v708
        %v710 = vpop.f32.mrb[0].mxu0
        %711 = vmatprep.mubr.f32.mxu0 0.0
        %v712 = vand.u32 %v222, 4294901760
        %v713 = vsub.f32 %v222, %v712
        %v714 = vand.u32 %v713, 4294901760
        %715 = vmatmul.mubr.f32.gmra.mrb[0].mxu0 %v714
        %v716 = vpop.f32.mrb[0].mxu0
        %v717 = vadd.f32 %v592, %v716
        %v718 = vpop.f32.mrb[0].mxu0
        %719 = vmatprep.mubr.f32.mxu0 0.0
        %v720 = vand.u32 %v225, 4294901760
        %v721 = vsub.f32 %v225, %v720
        %v722 = vand.u32 %v721, 4294901760
        %723 = vmatmul.mubr.f32.gmra.mrb[0].mxu0 %v722
        %v724 = vpop.f32.mrb[0].mxu0
        %v725 = vadd.f32 %v599, %v724
        %v726 = vpop.f32.mrb[0].mxu0
        %727 = vmatprep.mubr.f32.mxu0 0.0
        %v728 = vand.u32 %v228, 4294901760
        %v729 = vsub.f32 %v228, %v728
        %v730 = vand.u32 %v729, 4294901760
        %731 = vmatmul.mubr.f32.gmra.mrb[0].mxu0 %v730
        %v732 = vpop.f32.mrb[0].mxu0
        %v733 = vadd.f32 %v606, %v732
        %v734 = vpop.f32.mrb[0].mxu0
        %735 = vmatprep.mubr.f32.mxu0 0.0
        %v736 = vand.u32 %v231, 4294901760
        %v737 = vsub.f32 %v231, %v736
        %v738 = vand.u32 %v737, 4294901760
        %739 = vmatmul.mubr.f32.gmra.mrb[0].mxu0 %v738
        %v740 = vpop.f32.mrb[0].mxu0
        %v741 = vadd.f32 %v613, %v740
        %v742 = vpop.f32.mrb[0].mxu0
        %743 = vmatprep.mubr.f32.mxu0 0.0
        %v744 = vand.u32 %v234, 4294901760
        %v745 = vsub.f32 %v234, %v744
        %v746 = vand.u32 %v745, 4294901760
        %747 = vmatmul.mubr.f32.gmra.mrb[0].mxu0 %v746
        %v748 = vpop.f32.mrb[0].mxu0
        %v749 = vadd.f32 %v620, %v748
        %v750 = vpop.f32.mrb[0].mxu0
        %751 = vmatprep.mubr.f32.mxu0 0.0
        %v752 = vand.u32 %v237, 4294901760
        %v753 = vsub.f32 %v237, %v752
        %v754 = vand.u32 %v753, 4294901760
        %755 = vmatmul.mubr.f32.gmra.mrb[0].mxu0 %v754
        %v756 = vpop.f32.mrb[0].mxu0
        %v757 = vadd.f32 %v627, %v756
        %v758 = vpop.f32.mrb[0].mxu0
        %759 = vmatprep.mubr.f32.mxu0 0.0
        %v760 = vand.u32 %v240, 4294901760
        %v761 = vsub.f32 %v240, %v760
        %v762 = vand.u32 %v761, 4294901760
        %763 = vmatmul.mubr.f32.gmra.mrb[0].mxu0 %v762
        %v764 = vpop.f32.mrb[0].mxu0
        %v765 = vadd.f32 %v634, %v764
        %v766 = vpop.f32.mrb[0].mxu0
        %767 = vdwg.mxu0
        %768 = vmatprep.subr.mxu0 0.0
        %v769 = vand.u32 %v215, 4294901760
        %v770 = vsub.f32 %v215, %v769
        %v771 = vand.u32 %v770, 4294901760
        %772 = vmatpush1.msra.mxu0 %v771
        %773 = vmatprep.subr.mxu0 0.0
        %v774 = vand.u32 %v216, 4294901760
        %v775 = vsub.f32 %v216, %v774
        %v776 = vand.u32 %v775, 4294901760
        %777 = vmatpush1.msra.mxu0 %v776
        %778 = vmatprep.subr.mxu0 0.0
        %779 = vmatpush1.msra.mxu0 0.0
        %780 = vmatprep.subr.mxu0 0.0
        %781 = vmatpush1.msra.mxu0 0.0
        %782 = vmatprep.subr.mxu0 0.0
        %783 = vmatpush1.msra.mxu0 0.0
        %784 = vmatprep.subr.mxu0 0.0
        %785 = vmatpush1.msra.mxu0 0.0
        %786 = vmatprep.subr.mxu0 0.0
        %787 = vmatpush1.msra.mxu0 0.0
        %788 = vmatprep.subr.mxu0 0.0
        %789 = vmatpush1.msra.mxu0 0.0
        %790 = vmatprep.subr.mxu0 0.0
        %791 = vmatpush1.msra.mxu0 0.0
        %792 = vmatprep.subr.mxu0 0.0
        %793 = vmatpush1.msra.mxu0 0.0
        %794 = vmatprep.subr.mxu0 0.0
        %795 = vmatpush1.msra.mxu0 0.0
        %796 = vmatprep.subr.mxu0 0.0
        %797 = vmatpush1.msra.mxu0 0.0
        %798 = vmatprep.subr.mxu0 0.0
        %799 = vmatpush1.msra.mxu0 0.0
        %800 = vmatprep.subr.mxu0 0.0
        %801 = vmatpush1.msra.mxu0 0.0
        %802 = vmatprep.subr.mxu0 0.0
        %803 = vmatpush1.msra.mxu0 0.0
        %804 = vmatprep.subr.mxu0 0.0
        %805 = vmatpush1.msra.mxu0 0.0
        %806 = vmatprep.subr.mxu0 0.0
        %807 = vmatpush1.msra.mxu0 0.0
        %808 = vmatprep.subr.mxu0 0.0
        %809 = vmatpush1.msra.mxu0 0.0
        %810 = vmatprep.subr.mxu0 0.0
        %811 = vmatpush1.msra.mxu0 0.0
        %812 = vmatprep.subr.mxu0 0.0
        %813 = vmatpush1.msra.mxu0 0.0
        %814 = vmatprep.subr.mxu0 0.0
        %815 = vmatpush1.msra.mxu0 0.0
        %816 = vmatprep.subr.mxu0 0.0
        %817 = vmatpush1.msra.mxu0 0.0
        %818 = vmatprep.subr.mxu0 0.0
        %819 = vmatpush1.msra.mxu0 0.0
        %820 = vmatprep.subr.mxu0 0.0
        %821 = vmatpush1.msra.mxu0 0.0
        %822 = vmatprep.subr.mxu0 0.0
        %823 = vmatpush1.msra.mxu0 0.0
        %824 = vmatprep.subr.mxu0 0.0
        %825 = vmatpush1.msra.mxu0 0.0
        %826 = vmatprep.subr.mxu0 0.0
        %827 = vmatpush1.msra.mxu0 0.0
        %828 = vmatprep.subr.mxu0 0.0
        %829 = vmatpush1.msra.mxu0 0.0
        %830 = vmatprep.subr.mxu0 0.0
        %831 = vmatpush1.msra.mxu0 0.0
        %832 = vmatprep.subr.mxu0 0.0
        %833 = vmatpush1.msra.mxu0 0.0
        %834 = vmatprep.subr.mxu0 0.0
        %835 = vmatpush1.msra.mxu0 0.0
        %836 = vmatprep.subr.mxu0 0.0
        %837 = vmatpush1.msra.mxu0 0.0
        %838 = vmatprep.mubr.f32.mxu0 0.0
        %v839 = vand.u32 %v219, 4294901760
        %840 = vmatmul.mubr.f32.gmra.mrb[0].mxu0 %v839
        %v841 = vpop.f32.mrb[0].mxu0
        %v842 = vadd.f32 %v709, %v841
        %v843 = vpop.f32.mrb[0].mxu0
        %844 = vmatprep.mubr.f32.mxu0 0.0
        %v845 = vand.u32 %v222, 4294901760
        %846 = vmatmul.mubr.f32.gmra.mrb[0].mxu0 %v845
        %v847 = vpop.f32.mrb[0].mxu0
        %v848 = vadd.f32 %v717, %v847
        %v849 = vpop.f32.mrb[0].mxu0
        %850 = vmatprep.mubr.f32.mxu0 0.0
        %v851 = vand.u32 %v225, 4294901760
        %852 = vmatmul.mubr.f32.gmra.mrb[0].mxu0 %v851
        %v853 = vpop.f32.mrb[0].mxu0
        %v854 = vadd.f32 %v725, %v853
        %v855 = vpop.f32.mrb[0].mxu0
        %856 = vmatprep.mubr.f32.mxu0 0.0
        %v857 = vand.u32 %v228, 4294901760
        %858 = vmatmul.mubr.f32.gmra.mrb[0].mxu0 %v857
        %v859 = vpop.f32.mrb[0].mxu0
        %v860 = vadd.f32 %v733, %v859
        %v861 = vpop.f32.mrb[0].mxu0
        %862 = vmatprep.mubr.f32.mxu0 0.0
        %v863 = vand.u32 %v231, 4294901760
        %864 = vmatmul.mubr.f32.gmra.mrb[0].mxu0 %v863
        %v865 = vpop.f32.mrb[0].mxu0
        %v866 = vadd.f32 %v741, %v865
        %v867 = vpop.f32.mrb[0].mxu0
        %868 = vmatprep.mubr.f32.mxu0 0.0
        %v869 = vand.u32 %v234, 4294901760
        %870 = vmatmul.mubr.f32.gmra.mrb[0].mxu0 %v869
        %v871 = vpop.f32.mrb[0].mxu0
        %v872 = vadd.f32 %v749, %v871
        %v873 = vpop.f32.mrb[0].mxu0
        %874 = vmatprep.mubr.f32.mxu0 0.0
        %v875 = vand.u32 %v237, 4294901760
        %876 = vmatmul.mubr.f32.gmra.mrb[0].mxu0 %v875
        %v877 = vpop.f32.mrb[0].mxu0
        %v878 = vadd.f32 %v757, %v877
        %v879 = vpop.f32.mrb[0].mxu0
        %880 = vmatprep.mubr.f32.mxu0 0.0
        %v881 = vand.u32 %v240, 4294901760
        %882 = vmatmul.mubr.f32.gmra.mrb[0].mxu0 %v881
        %v883 = vpop.f32.mrb[0].mxu0
        %v884 = vadd.f32 %v765, %v883
        %v885 = vpop.f32.mrb[0].mxu0
        %886 = vdwg.mxu0
        %887 = vmatprep.subr.mxu0 0.0
        %v888 = vand.u32 %v215, 4294901760
        %889 = vmatpush1.msra.mxu0 %v888
        %890 = vmatprep.subr.mxu0 0.0
        %v891 = vand.u32 %v216, 4294901760
        %892 = vmatpush1.msra.mxu0 %v891
        %893 = vmatprep.subr.mxu0 0.0
        %894 = vmatpush1.msra.mxu0 0.0
        %895 = vmatprep.subr.mxu0 0.0
        %896 = vmatpush1.msra.mxu0 0.0
        %897 = vmatprep.subr.mxu0 0.0
        %898 = vmatpush1.msra.mxu0 0.0
        %899 = vmatprep.subr.mxu0 0.0
        %900 = vmatpush1.msra.mxu0 0.0
        %901 = vmatprep.subr.mxu0 0.0
        %902 = vmatpush1.msra.mxu0 0.0
        %903 = vmatprep.subr.mxu0 0.0
        %904 = vmatpush1.msra.mxu0 0.0
        %905 = vmatprep.subr.mxu0 0.0
        %906 = vmatpush1.msra.mxu0 0.0
        %907 = vmatprep.subr.mxu0 0.0
        %908 = vmatpush1.msra.mxu0 0.0
        %909 = vmatprep.subr.mxu0 0.0
        %910 = vmatpush1.msra.mxu0 0.0
        %911 = vmatprep.subr.mxu0 0.0
        %912 = vmatpush1.msra.mxu0 0.0
        %913 = vmatprep.subr.mxu0 0.0
        %914 = vmatpush1.msra.mxu0 0.0
        %915 = vmatprep.subr.mxu0 0.0
        %916 = vmatpush1.msra.mxu0 0.0
        %917 = vmatprep.subr.mxu0 0.0
        %918 = vmatpush1.msra.mxu0 0.0
        %919 = vmatprep.subr.mxu0 0.0
        %920 = vmatpush1.msra.mxu0 0.0
        %921 = vmatprep.subr.mxu0 0.0
        %922 = vmatpush1.msra.mxu0 0.0
        %923 = vmatprep.subr.mxu0 0.0
        %924 = vmatpush1.msra.mxu0 0.0
        %925 = vmatprep.subr.mxu0 0.0
        %926 = vmatpush1.msra.mxu0 0.0
        %927 = vmatprep.subr.mxu0 0.0
        %928 = vmatpush1.msra.mxu0 0.0
        %929 = vmatprep.subr.mxu0 0.0
        %930 = vmatpush1.msra.mxu0 0.0
        %931 = vmatprep.subr.mxu0 0.0
        %932 = vmatpush1.msra.mxu0 0.0
        %933 = vmatprep.subr.mxu0 0.0
        %934 = vmatpush1.msra.mxu0 0.0
        %935 = vmatprep.subr.mxu0 0.0
        %936 = vmatpush1.msra.mxu0 0.0
        %937 = vmatprep.subr.mxu0 0.0
        %938 = vmatpush1.msra.mxu0 0.0
        %939 = vmatprep.subr.mxu0 0.0
        %940 = vmatpush1.msra.mxu0 0.0
        %941 = vmatprep.subr.mxu0 0.0
        %942 = vmatpush1.msra.mxu0 0.0
        %943 = vmatprep.subr.mxu0 0.0
        %944 = vmatpush1.msra.mxu0 0.0
        %945 = vmatprep.subr.mxu0 0.0
        %946 = vmatpush1.msra.mxu0 0.0
        %947 = vmatprep.subr.mxu0 0.0
        %948 = vmatpush1.msra.mxu0 0.0
        %949 = vmatprep.subr.mxu0 0.0
        %950 = vmatpush1.msra.mxu0 0.0
        %951 = vmatprep.subr.mxu0 0.0
        %952 = vmatpush1.msra.mxu0 0.0
        %953 = vmatprep.mubr.f32.mxu0 0.0
        %v954 = vand.u32 %v219, 4294901760
        %955 = vmatmul.mubr.f32.gmra.mrb[0].mxu0 %v954
        %v956 = vpop.f32.mrb[0].mxu0
        %v957 = vadd.f32 %v842, %v956
        %v958 = vpop.f32.mrb[0].mxu0
        %959 = vmatprep.mubr.f32.mxu0 0.0
        %v960 = vand.u32 %v222, 4294901760
        %961 = vmatmul.mubr.f32.gmra.mrb[0].mxu0 %v960
        %v962 = vpop.f32.mrb[0].mxu0
        %v963 = vadd.f32 %v848, %v962
        %v964 = vpop.f32.mrb[0].mxu0
        %965 = vmatprep.mubr.f32.mxu0 0.0
        %v966 = vand.u32 %v225, 4294901760
        %967 = vmatmul.mubr.f32.gmra.mrb[0].mxu0 %v966
        %v968 = vpop.f32.mrb[0].mxu0
        %v969 = vadd.f32 %v854, %v968
        %v970 = vpop.f32.mrb[0].mxu0
        %971 = vmatprep.mubr.f32.mxu0 0.0
        %v972 = vand.u32 %v228, 4294901760
        %973 = vmatmul.mubr.f32.gmra.mrb[0].mxu0 %v972
        %v974 = vpop.f32.mrb[0].mxu0
        %v975 = vadd.f32 %v860, %v974
        %v976 = vpop.f32.mrb[0].mxu0
        %977 = vmatprep.mubr.f32.mxu0 0.0
        %v978 = vand.u32 %v231, 4294901760
        %979 = vmatmul.mubr.f32.gmra.mrb[0].mxu0 %v978
        %v980 = vpop.f32.mrb[0].mxu0
        %v981 = vadd.f32 %v866, %v980
        %v982 = vpop.f32.mrb[0].mxu0
        %983 = vmatprep.mubr.f32.mxu0 0.0
        %v984 = vand.u32 %v234, 4294901760
        %985 = vmatmul.mubr.f32.gmra.mrb[0].mxu0 %v984
        %v986 = vpop.f32.mrb[0].mxu0
        %v987 = vadd.f32 %v872, %v986
        %v988 = vpop.f32.mrb[0].mxu0
        %989 = vmatprep.mubr.f32.mxu0 0.0
        %v990 = vand.u32 %v237, 4294901760
        %991 = vmatmul.mubr.f32.gmra.mrb[0].mxu0 %v990
        %v992 = vpop.f32.mrb[0].mxu0
        %v993 = vadd.f32 %v878, %v992
        %v994 = vpop.f32.mrb[0].mxu0
        %995 = vmatprep.mubr.f32.mxu0 0.0
        %v996 = vand.u32 %v240, 4294901760
        %997 = vmatmul.mubr.f32.gmra.mrb[0].mxu0 %v996
        %v998 = vpop.f32.mrb[0].mxu0
        %v999 = vadd.f32 %v884, %v998
        %v1000 = vpop.f32.mrb[0].mxu0
        %1001 = vdwg.mxu0
        %vm1002 = vcmask 261120
        %1003 = vst.msk [vmem:[%s175] sm:$0xff] %vm1002, %v957
        %1004 = vst.msk [vmem:[%s175 + $0x8] sm:$0xff] %vm1002, %v963
        %1005 = vst.msk [vmem:[%s175 + $0x10] sm:$0xff] %vm1002, %v969
        %1006 = vst.msk [vmem:[%s175 + $0x18] sm:$0xff] %vm1002, %v975
        %1007 = vst.msk [vmem:[%s175 + $0x20] sm:$0xff] %vm1002, %v981
        %1008 = vst.msk [vmem:[%s175 + $0x28] sm:$0xff] %vm1002, %v987
        %1009 = vst.msk [vmem:[%s175 + $0x30] sm:$0xff] %vm1002, %v993
        %1010 = vst.msk [vmem:[%s175 + $0x38] sm:$0xff] %vm1002, %v999
        %1019 = vrot.lane.b32.xlu0 %v957, 32
        %v1020 = vpop.permute.xlu0 %1019
        %1021 = vrot.lane.b32.xlu0 %v963, 32
        %v1022 = vpop.permute.xlu0 %1021
        %1023 = vrot.lane.b32.xlu0 %v969, 32
        %v1024 = vpop.permute.xlu0 %1023
        %1025 = vrot.lane.b32.xlu0 %v975, 32
        %v1026 = vpop.permute.xlu0 %1025
        %1027 = vrot.lane.b32.xlu0 %v981, 32
        %v1028 = vpop.permute.xlu0 %1027
        %1029 = vrot.lane.b32.xlu0 %v987, 32
        %v1030 = vpop.permute.xlu0 %1029
        %1031 = vrot.lane.b32.xlu0 %v993, 32
        %v1032 = vpop.permute.xlu0 %1031
        %1033 = vrot.lane.b32.xlu0 %v999, 32
        %v1034 = vpop.permute.xlu0 %1033
        %vm1043 = vcmask 523520
        %1044 = vst.msk [vmem:[%s175] sm:$0xff] %vm1043, %v1020
        %1045 = vst.msk [vmem:[%s175 + $0x8] sm:$0xff] %vm1043, %v1022
        %1046 = vst.msk [vmem:[%s175 + $0x10] sm:$0xff] %vm1043, %v1024
        %1047 = vst.msk [vmem:[%s175 + $0x18] sm:$0xff] %vm1043, %v1026
        %1048 = vst.msk [vmem:[%s175 + $0x20] sm:$0xff] %vm1043, %v1028
        %1049 = vst.msk [vmem:[%s175 + $0x28] sm:$0xff] %vm1043, %v1030
        %1050 = vst.msk [vmem:[%s175 + $0x30] sm:$0xff] %vm1043, %v1032
        %1051 = vst.msk [vmem:[%s175 + $0x38] sm:$0xff] %vm1043, %v1034
        %s1052 = sand.u32 %s88, 1
        %s1053 = scalar_lea.sflag [#allocation3], %s1052
        %s1054 = sand.u32 %s88, 1
        %s1055 = smul.addr %s1054, 64
        %s1056 = scalar_lea.vmem [#allocation5], %s1055
        // Predicated region
        $region33: #{tpu_custom_call.1} parent=27 // pred_check
          %p1057 = pneg %p98
        $region34: #{tpu_custom_call.1} parent=27 // pred_check_branch
          %1059 = sbr.rel (%p1057) target = $region36
        $region35: #{tpu_custom_call.1} parent=27 // pred_region
          %s1060 = smul.u32 8, %s22
          %s1062 = ssub.s32 1024, 1024
          %1063 = vsyncadd %s1053, %s1062
          %s1064 = smul.addr %s21, 8
          %s1065 = sadd.s32 %s1060, %s1064
          %s1066 = smul.addr %s1065, 128
          %s1067 = scalar_lea.hbm %s2, %s1066
          %s1068 = sshll.u32 %s1056, 4
          %s1069 = int_to_ptr.vmem [resolvable:$true] %s1068
          %1074 = dma.vmem_to_hbm [thread:$0]  %s1069, 1024, %s1067, %s1053, 128, 128, 8
        $region36: #{tpu_custom_call.1} parent=27 // pred_fallthru
          _
      $region28: #{tpu_custom_call.1} parent=5 // pred_fallthru
        _
      %p1075 = scmp.le.s32.totalorder 2, %s12
      // Predicated region
      $region37: #{tpu_custom_call.1} parent=5 // pred_check
        %p1076 = pneg %p1075
      $region38: #{tpu_custom_call.1} parent=5 // pred_check_branch
        %1078 = sbr.rel (%p1076) target = $region40
      $region39: #{tpu_custom_call.1} parent=5 // pred_region
        %s1079 = ssub.s32 %s12, 2
        // Predicated region
        $region41: #{tpu_custom_call.1} parent=39 // pred_check
          %p1080 = pneg %p104
        $region42: #{tpu_custom_call.1} parent=39 // pred_check_branch
          %1082 = sbr.rel (%p1080) target = $region44
        $region43: #{tpu_custom_call.1} parent=39 // pred_region
          %s1083 = sand.u32 %s89, 1
          %s1084 = scalar_lea.sflag [#allocation3], %s1083
          %s1085 = sand.u32 %s89, 1
          %s1086 = smul.addr %s1085, 64
          %s1087 = scalar_lea.vmem [#allocation5], %s1086
          %1088 = dma.done %s1084, 1024
        $region44: #{tpu_custom_call.1} parent=39 // pred_fallthru
          _
      $region40: #{tpu_custom_call.1} parent=5 // pred_fallthru
        _
    $region6: #{tpu_custom_call.1} parent=1 // loop_footer
      %s16 = sadd.s32 1, %s12
    $region7: #{tpu_custom_call.1} parent=1 // loop_footer_branch
      %11 = sbr.rel target = $region3
    $region8: #{tpu_custom_call.1} parent=1 // loop_exit
      _
    %1089 = vsyncpa [#allocation3], 1
    %s1090 = scalar_lea.sflag [#allocation3], 1
    %1091 = vsyncpa %s1090, 1
    %1092 = vsyncpa [#allocation4], 1
    %s1093 = scalar_lea.sflag [#allocation4], 1
    %1094 = vsyncpa %s1093, 1

</llo_original>
